<compile_context>
chip_gen: v7x
topology: tpu7x:2x2x1
jax: 0.10.0
libtpu: 0.0.40
codegen_flags: <defaults>
</compile_context>

<pallas_src>
import functools
import math

import jax
import jax.numpy as jnp
from jax.experimental import pallas as pl
from jax.experimental.pallas import tpu as pltpu

_LANES = 128
_MAX_TILE_ROWS = 8192   # big enough to amortize the ~0.35 us per-grid-step cost
_F32_TEMPS = 6          # conservative count of whole-block f32 temporaries


# ----------------------------------------------------------------------------
# Helpers
# ----------------------------------------------------------------------------
def _sublane_align(dtype):
    """Packed sublane count: 8 for 4-byte, 16 for 2-byte, 32 for 1-byte dtypes."""
    return max(8, 32 // jnp.dtype(dtype).itemsize)


def _vmem_caps():
    """(physical_capacity, tiling_budget) in bytes, derived per chip generation."""
    try:
        cap = int(pltpu.get_tpu_info().vmem_capacity_bytes)
    except Exception:  # pragma: no cover - conservative fallback (v7x-sized)
        cap = 64 << 20
    budget = int(min(cap // 2, 64 << 20))
    return cap, budget


# ----------------------------------------------------------------------------
# Kernels
# ----------------------------------------------------------------------------
def _per_elem_loss(mu1, ls1, mu2, ls2, epsilon):
    """Element-wise uncertainty-weighted consistency loss, accumulated in f32.

    exp() is evaluated at bf16 when the inputs are bf16 (doubles EUP rate on
    v6e/v7x where the EUP can become the binding slot); everything else is f32.
    The reciprocal is an exact VPU divide (NOT an EUP vrcp) by design — see
    module docstring.
    """
    exp_dt = ls1.dtype if ls1.dtype == jnp.bfloat16 else jnp.float32
    s1 = jnp.exp(ls1.astype(exp_dt)).astype(jnp.float32)
    s2 = jnp.exp(ls2.astype(exp_dt)).astype(jnp.float32)
    denom = s1 + s2 + jnp.float32(epsilon)
    d = mu1.astype(jnp.float32) - mu2.astype(jnp.float32)
    return (d * d) / denom


def _none_kernel(mu1_ref, ls1_ref, mu2_ref, ls2_ref, out_ref, *, epsilon):
    """Per-element loss tile.  Partial edge blocks need no masking: Pallas only
    stores the valid region of the output block."""
    out_ref[...] = _per_elem_loss(
        mu1_ref[...], ls1_ref[...], mu2_ref[...], ls2_ref[...], epsilon
    ).astype(out_ref.dtype)


def _block_sum_kernel(mu1_ref, ls1_ref, mu2_ref, ls2_ref, out_ref, *,
                      epsilon, tile_rows, valid_rows):
    """Each grid step reduces its own block to a scalar partial sum in SMEM.
    No carried accumulator -> every step is independent -> the grid axis can be
    'parallel' (v7x megacore sharding for free)."""
    loss = _per_elem_loss(mu1_ref[...], ls1_ref[...], mu2_ref[...],
                          ls2_ref[...], epsilon)
    if valid_rows is not None:
        # Statically-known ragged row tail: rows >= valid_rows of the last
        # (partial) block hold stale VMEM garbage — select them away.  This is
        # a cheap VPU select; the kernel is HBM-bound.
        row0 = pl.program_id(0) * tile_rows
        rid = row0 + jax.lax.broadcasted_iota(jnp.int32, (tile_rows, 1), 0)
        loss = jnp.where(rid < valid_rows, loss, jnp.float32(0.0))
    out_ref[0, 0] = jnp.sum(loss)


# ----------------------------------------------------------------------------
# Wrapper
# ----------------------------------------------------------------------------
def uncertainty_weighted_consistency_loss(mu_pred1, log_sigma_sq_pred1,
                                          mu_pred2, log_sigma_sq_pred2,
                                          *, reduction="mean",
                                          epsilon=1e-6,
                                          max_tile_rows=_MAX_TILE_ROWS):
    if reduction not in ("mean", "sum", "none"):
        raise ValueError(f"Reduction method '{reduction}' not supported.")
    shape = mu_pred1.shape
    if not (shape == log_sigma_sq_pred1.shape == mu_pred2.shape
            == log_sigma_sq_pred2.shape):
        raise ValueError(
            "All input tensors for consistency loss must have the same shape.")

    in_dtype = mu_pred1.dtype
    itemsize = jnp.dtype(in_dtype).itemsize
    sub = _sublane_align(in_dtype)
    total = int(math.prod(shape))
    cap, budget = _vmem_caps()

    if total == 0:  # degenerate empty input
        if reduction == "none":
            return jnp.zeros(shape, in_dtype)
        val = jnp.float32(0.0) if reduction == "sum" else jnp.float32(jnp.nan)
        return val.astype(in_dtype)

    # Bytes per element resident in VMEM per grid step:
    # double-buffered operand streams + whole-block f32 temporaries.
    n_streams = 5 if reduction == "none" else 4

    def per_row(width):
        return width * (n_streams * 2 * itemsize + _F32_TEMPS * 4)

    # ---- zero-copy lane view (R, W) ----------------------------------------
    needs_pad = False
    if total % _LANES == 0:
        R, W = total // _LANES, _LANES                # free reshape, lane-dense
    else:
        W = int(shape[-1]) if len(shape) else 1
        R = total // W                                # free collapse of leading dims
        if per_row(W) * sub > budget:
            # Pathologically wide ragged rows: fall back to a zero-padded
            # lane-dense view (rare; zeros contribute exactly 0 to the loss).
            needs_pad = True
            R, W = pl.cdiv(total, _LANES), _LANES

    # ---- tile sizing --------------------------------------------------------
    per_row_bytes = per_row(W)
    candidate = max(1, min(int(max_tile_rows), budget // per_row_bytes))
    if R <= candidate:
        tile_r = R                          # single full-extent block (always legal)
    else:
        tile_r = max(sub, (candidate // sub) * sub)
    num_blocks = pl.cdiv(R, tile_r)
    ragged_rows = (R % tile_r) != 0         # only possible when num_blocks > 1

    footprint = tile_r * per_row_bytes
    vmem_limit = int(min(cap * 3 // 4, max(8 << 20, footprint + footprint // 4)))

    def _view(a):
        if needs_pad:
            flat = jnp.reshape(a, (-1,))
            flat = jnp.pad(flat, (0, R * _LANES - total))
            return flat.reshape(R, _LANES)
        return jnp.reshape(a, (R, W))

    views = tuple(_view(a) for a in (mu_pred1, log_sigma_sq_pred1,
                                     mu_pred2, log_sigma_sq_pred2))

    in_spec = pl.BlockSpec((tile_r, W), lambda i: (i, 0))

    if reduction == "none":
        out = pl.pallas_call(
            functools.partial(_none_kernel, epsilon=epsilon),
            out_shape=jax.ShapeDtypeStruct((R, W), in_dtype),
            grid_spec=pltpu.PrefetchScalarGridSpec(
                num_scalar_prefetch=0,
                grid=(num_blocks,),
                in_specs=[in_spec] * 4,
                out_specs=in_spec,
            ),
            compiler_params=pltpu.CompilerParams(
                dimension_semantics=("parallel",),
                vmem_limit_bytes=vmem_limit),
            cost_estimate=pl.CostEstimate(
                flops=6 * total,
                transcendentals=2 * total,
                bytes_accessed=5 * itemsize * total),
        )(*views)
        if needs_pad:
            return out.reshape(-1)[:total].reshape(shape)
        return out.reshape(shape)

    # 'mean' / 'sum': per-block scalar partials, finished in the wrapper.
    out_spec = pl.BlockSpec((1, 1), lambda i: (i, 0), memory_space=pltpu.SMEM)
    partials = pl.pallas_call(
        functools.partial(_block_sum_kernel, epsilon=epsilon,
                          tile_rows=tile_r,
                          valid_rows=R if ragged_rows else None),
        out_shape=jax.ShapeDtypeStruct((num_blocks, 1), jnp.float32),
        grid_spec=pltpu.PrefetchScalarGridSpec(
            num_scalar_prefetch=0,
            grid=(num_blocks,),
            in_specs=[in_spec] * 4,
            out_specs=out_spec,
        ),
        compiler_params=pltpu.CompilerParams(
            dimension_semantics=("parallel",),
            vmem_limit_bytes=vmem_limit),
        cost_estimate=pl.CostEstimate(
            flops=6 * total,
            transcendentals=2 * total,
            bytes_accessed=4 * itemsize * total + 4 * num_blocks),
    )(*views)

    result = jnp.sum(partials)
    if reduction == "mean":
        result = result / jnp.float32(total)
    return result.astype(in_dtype)


# ----------------------------------------------------------------------------
# Reference (pure JAX, f32) and self-test
# ----------------------------------------------------------------------------
def _ref(mu1, ls1, mu2, ls2, reduction, epsilon=1e-6):
    mu1, ls1, mu2, ls2 = (a.astype(jnp.float32) for a in (mu1, ls1, mu2, ls2))
    w = 1.0 / (jnp.exp(ls1) + jnp.exp(ls2) + epsilon)
    per_elem = w * (mu1 - mu2) ** 2
    if reduction == "mean":
        return per_elem.mean()
    if reduction == "sum":
        return per_elem.sum()
    return per_elem


if __name__ == "__main__":
    key = jax.random.PRNGKey(0)

    def make_inputs(shape, dtype, salt):
        k1, k2, k3, k4 = jax.random.split(jax.random.fold_in(key, salt), 4)
        mu1 = jax.random.normal(k1, shape, dtype=jnp.float32)
        ls1 = jax.random.normal(k2, shape, dtype=jnp.float32) * 0.5
        mu2 = jax.random.normal(k3, shape, dtype=jnp.float32)
        ls2 = jax.random.normal(k4, shape, dtype=jnp.float32) * 0.5
        return tuple(a.astype(dtype) for a in (mu1, ls1, mu2, ls2))

    cases = [
        # shape, dtype, max_tile_rows, rtol, atol
        ((8, 32),   jnp.float32,  _MAX_TILE_ROWS, 1e-5, 1e-5),  # lane-aligned, single block
        ((5, 33),   jnp.float32,  _MAX_TILE_ROWS, 1e-5, 1e-5),  # ragged last dim, full-dims block
        ((10, 128), jnp.float32,  8,              1e-5, 1e-5),  # multi-block + ragged row tail (mask path)
        ((37, 40),  jnp.float32,  16,             1e-5, 1e-5),  # ragged lanes + ragged row tail (mask path)
        ((8, 32),   jnp.bfloat16, _MAX_TILE_ROWS, 2e-2, 2e-2),  # bf16 exp path
    ]

    for salt, (shape, dtype, mtr, rtol, atol) in enumerate(cases):
        ins = make_inputs(shape, dtype, salt)
        for reduction in ("mean", "sum", "none"):
            out = uncertainty_weighted_consistency_loss(
                *ins, reduction=reduction, max_tile_rows=mtr)
            out = jax.block_until_ready(out)
            expect = _ref(*ins, reduction)
            if reduction == "none":
                assert out.shape == shape, (shape, dtype, reduction, out.shape)
            ok = jnp.allclose(jnp.asarray(out, jnp.float32), expect,
                              rtol=rtol, atol=atol)
            assert bool(ok), (shape, str(dtype), reduction)

    print("KERNEL_OK")
</pallas_src>

<mosaic_0001>
module attributes {stable_mosaic.version = 11 : i64} {
  func.func @_block_sum_kernel(%arg0: i32, %arg1: memref<2x128xf32, #tpu.memory_space<vmem>>, %arg2: memref<2x128xf32, #tpu.memory_space<vmem>>, %arg3: memref<2x128xf32, #tpu.memory_space<vmem>>, %arg4: memref<2x128xf32, #tpu.memory_space<vmem>>, %arg5: memref<1x1xf32, #tpu.memory_space<smem>>) attributes {dimension_semantics = [#tpu.dimension_semantics<parallel>], iteration_bounds = array<i64: 1>, scalar_prefetch = 0 : i64, scratch_operands = 0 : i64, tpu.core_type = #tpu.core_type<tc>, window_params = [{transform_indices = @transform_0, window_bounds = array<i64: 2, 128>}, {transform_indices = @transform_1, window_bounds = array<i64: 2, 128>}, {transform_indices = @transform_2, window_bounds = array<i64: 2, 128>}, {transform_indices = @transform_3, window_bounds = array<i64: 2, 128>}, {transform_indices = @transform_4, window_bounds = array<i64: 1, 1>}]} {
    %c0 = arith.constant 0 : index
    %c0_0 = arith.constant 0 : index
    %0 = vector.load %arg1[%c0, %c0_0] : memref<2x128xf32, #tpu.memory_space<vmem>>, vector<2x128xf32>
    %c0_1 = arith.constant 0 : index
    %c0_2 = arith.constant 0 : index
    %1 = vector.load %arg2[%c0_1, %c0_2] : memref<2x128xf32, #tpu.memory_space<vmem>>, vector<2x128xf32>
    %c0_3 = arith.constant 0 : index
    %c0_4 = arith.constant 0 : index
    %2 = vector.load %arg3[%c0_3, %c0_4] : memref<2x128xf32, #tpu.memory_space<vmem>>, vector<2x128xf32>
    %c0_5 = arith.constant 0 : index
    %c0_6 = arith.constant 0 : index
    %3 = vector.load %arg4[%c0_5, %c0_6] : memref<2x128xf32, #tpu.memory_space<vmem>>, vector<2x128xf32>
    %4 = math.exp %1 : vector<2x128xf32>
    %5 = math.exp %3 : vector<2x128xf32>
    %6 = arith.addf %4, %5 : vector<2x128xf32>
    %cst = arith.constant 9.99999997E-7 : f32
    %7 = vector.broadcast %cst : f32 to vector<2x128xf32>
    %8 = arith.addf %6, %7 : vector<2x128xf32>
    %9 = arith.subf %0, %2 : vector<2x128xf32>
    %10 = arith.mulf %9, %9 : vector<2x128xf32>
    %11 = arith.divf %10, %8 : vector<2x128xf32>
    %12 = vector.shape_cast %11 : vector<2x128xf32> to vector<1x2x128xf32>
    %cst_7 = arith.constant dense<0.000000e+00> : vector<1xf32>
    %13 = vector.multi_reduction <add>, %12, %cst_7 [1, 2] : vector<1x2x128xf32> to vector<1xf32>
    %14 = vector.shape_cast %13 : vector<1xf32> to vector<1x1x1xf32>
    %15 = vector.extract %14[0, 0, 0] : f32 from vector<1x1x1xf32>
    %c0_8 = arith.constant 0 : index
    %c0_9 = arith.constant 0 : index
    %16 = memref.load %arg5[%c0_8, %c0_9] : memref<1x1xf32, #tpu.memory_space<smem>>
    memref.store %15, %arg5[%c0_8, %c0_9] : memref<1x1xf32, #tpu.memory_space<smem>>
    return
  }
  func.func @transform_0(%arg0: i32) -> (i32, i32) {
    %c0_i32 = arith.constant 0 : i32
    %c0_i32_0 = arith.constant 0 : i32
    return %arg0, %c0_i32 : i32, i32
  }
  func.func @transform_1(%arg0: i32) -> (i32, i32) {
    %c0_i32 = arith.constant 0 : i32
    %c0_i32_0 = arith.constant 0 : i32
    return %arg0, %c0_i32 : i32, i32
  }
  func.func @transform_2(%arg0: i32) -> (i32, i32) {
    %c0_i32 = arith.constant 0 : i32
    %c0_i32_0 = arith.constant 0 : i32
    return %arg0, %c0_i32 : i32, i32
  }
  func.func @transform_3(%arg0: i32) -> (i32, i32) {
    %c0_i32 = arith.constant 0 : i32
    %c0_i32_0 = arith.constant 0 : i32
    return %arg0, %c0_i32 : i32, i32
  }
  func.func @transform_4(%arg0: i32) -> (i32, i32) {
    %c0_i32 = arith.constant 0 : i32
    %c0_i32_0 = arith.constant 0 : i32
    return %arg0, %c0_i32 : i32, i32
  }
}

</mosaic_0001>

<llo_original>
// kernel: tpu_custom_call.1
$region0: #{tpu_custom_call.1}
  #allocation0 [shape = 'u32[]', space=smem, size = 0x4, offset = 0x4, fixed_abs, tag = 'smem constant byte address 0x4 - core index']
  #allocation1 [shape = 'u32[144,128]{1,0:T(1,128)}', space=vmem, size = 0x12000, scoped, tag = 'internal scratch']
  %s0 = inlined_call_operand.hbm [shape: f32[2,128], index: 0, kind: input, shape index: {}]
  %s1 = inlined_call_operand.vmem [shape: f32[2,128], index: 1, kind: input, shape index: {}]
  %s2 = inlined_call_operand.vmem [shape: f32[2,128], index: 2, kind: input, shape index: {}]
  %s3 = inlined_call_operand.vmem [shape: f32[2,128], index: 3, kind: input, shape index: {}]
  %s4 = inlined_call_operand.hbm [shape: f32[1,1], index: 4, kind: output, shape index: {}]
  %s5 = sld [smem:[#allocation0]]
  $region30: #{tpu_custom_call.1} parent=0
    _
  %s7 = ssub.s32 1, %s5
  %s8 = scalar_select 0, %s7, %s5
  $region1: #{tpu_custom_call.1} parent=0
    #allocation2 [shape = 'u8[1024]{0}', space=vmem, size = 0x400, scoped, tag = 'input window, operand 0, single buffered']
    #allocation3 [shape = 's32[1]{0}', space=sflag, size = 0x4, scoped, tag = 'scoped memory for tpu_custom_call.1']
    #allocation4 [shape = 's32[1]{0}', space=sflag, size = 0x4, scoped, tag = 'scoped memory for tpu_custom_call.1']
    #allocation5 [shape = 'u8[512]{0}', space=smem, size = 0x200, scoped, tag = 'output window, operand 0, single buffered']
    %9 = vsyncpa [#allocation3], 0
    %10 = vsyncpa [#allocation4], 0
    // Predicated region
    $region2: #{tpu_custom_call.1} parent=1 // pred_check
      _
    $region3: #{tpu_custom_call.1} parent=1 // pred_check_branch
      %12 = sbr.rel (0) target = $region5
    $region4: #{tpu_custom_call.1} parent=1 // pred_region
      %s14 = ssub.s32 32, 32
      %15 = vsyncadd [#allocation3], %s14
      %s17 = sshll.u32 [#allocation2], 4
      %s18 = int_to_ptr.vmem [resolvable:$true] %s17
      %20 = dma.hbm_to_vmem [thread:$0]  %s0, 32, %s18, [#allocation3]
    $region5: #{tpu_custom_call.1} parent=1 // pred_fallthru
      _
    // Predicated region
    $region6: #{tpu_custom_call.1} parent=1 // pred_check
      _
    $region7: #{tpu_custom_call.1} parent=1 // pred_check_branch
      %22 = sbr.rel (0) target = $region9
    $region8: #{tpu_custom_call.1} parent=1 // pred_region
      _
    $region9: #{tpu_custom_call.1} parent=1 // pred_fallthru
      _
    // Predicated region
    $region10: #{tpu_custom_call.1} parent=1 // pred_check
      _
    $region11: #{tpu_custom_call.1} parent=1 // pred_check_branch
      %24 = sbr.rel (0) target = $region13
    $region12: #{tpu_custom_call.1} parent=1 // pred_region
      _
    $region13: #{tpu_custom_call.1} parent=1 // pred_fallthru
      _
    // Predicated region
    $region14: #{tpu_custom_call.1} parent=1 // pred_check
      _
    $region15: #{tpu_custom_call.1} parent=1 // pred_check_branch
      %26 = sbr.rel (0) target = $region17
    $region16: #{tpu_custom_call.1} parent=1 // pred_region
      _
    $region17: #{tpu_custom_call.1} parent=1 // pred_fallthru
      _
    // Predicated region
    $region18: #{tpu_custom_call.1} parent=1 // pred_check
      _
    $region19: #{tpu_custom_call.1} parent=1 // pred_check_branch
      %28 = sbr.rel (0) target = $region21
    $region20: #{tpu_custom_call.1} parent=1 // pred_region
      %29 = dma.done [#allocation3], 32
    $region21: #{tpu_custom_call.1} parent=1 // pred_fallthru
      _
    %v30 = vld [vmem:[#allocation2] sm:$0x3]
    %v31 = vld [vmem:[%s1] sm:$0x3]
    %v32 = vld [vmem:[%s2] sm:$0x3]
    %v33 = vld [vmem:[%s3] sm:$0x3]
    %v34 = vmul.f32 %v31, 1.442695
    %v35 = vpow.pop %v34
    %v36 = vmul.f32 %v33, 1.442695
    %v37 = vpow.pop %v36
    %v38 = vadd.f32 %v35, %v37
    %v39 = vadd.f32 %v38, 1e-06
    %v40 = vsub.f32 %v30, %v32
    %v41 = vmul.f32 %v40, %v40
    %v42 = vrcp.pop %v39
    %v43 = vmul.f32 %v41, %v42
    %vm44 = vcmask 1041408
    %v45 = vsel %vm44, %v43, 0.0
    %46 = vadd.xlane.f32.xlu0 %v45
    %v47 = vpop.xlane.xlu0 %46
    %v48 = vrot.slane %v47, 4
    %v49 = vadd.f32 %v47, %v48
    %v50 = vrot.slane %v49, 2
    %v51 = vadd.f32 %v49, %v50
    %v52 = vrot.slane %v51, 1
    %v53 = vadd.f32 %v51, %v52
    %s54 = vtos %v53
    %s55 = scalar_lea.smem [#allocation5], 0
    %56 = sst [smem:[%s55]] %s54
    // Predicated region
    $region22: #{tpu_custom_call.1} parent=1 // pred_check
      _
    $region23: #{tpu_custom_call.1} parent=1 // pred_check_branch
      %58 = sbr.rel (0) target = $region25
    $region24: #{tpu_custom_call.1} parent=1 // pred_region
      %s60 = ssub.s32 16, 16
      %61 = vsyncadd [#allocation4], %s60
      %64 = dma.smem_to_hbm [#allocation5], 16, %s4, [#allocation4]
    $region25: #{tpu_custom_call.1} parent=1 // pred_fallthru
      _
    // Predicated region
    $region26: #{tpu_custom_call.1} parent=1 // pred_check
      _
    $region27: #{tpu_custom_call.1} parent=1 // pred_check_branch
      %66 = sbr.rel (0) target = $region29
    $region28: #{tpu_custom_call.1} parent=1 // pred_region
      %67 = dma.done [#allocation4], 16
    $region29: #{tpu_custom_call.1} parent=1 // pred_fallthru
      _
    %68 = sfence
    %69 = vsyncpa [#allocation3], 1
    %70 = vsyncpa [#allocation4], 1

</llo_original>
